<compile_context>
chip_gen: v7x
topology: tpu7x:2x2x1
jax: 0.10.0
libtpu: 0.0.40
codegen_flags: <defaults>
</compile_context>

<pallas_src>
import math

import jax
import jax.numpy as jnp
from jax import lax
from jax.experimental import pallas as pl
from jax.experimental.pallas import tpu as pltpu


def _make_self_attention_kernel(mxu_dtype, e_dtype):
    """Build the kernel body; mxu_dtype = MXU operand dtype, e_dtype = exp-result dtype."""

    def kernel(k_ref, q_ref, v_ref, o_ref):
        # Blocks: k_ref/o_ref are (1, TILE_K, D); q_ref/v_ref are (1, Nq, D) (resident per batch).
        k = k_ref[0]          # (TILE_K, D)
        q = q_ref[0]          # (Nq, D)
        v = v_ref[0]          # (Nq, D)

        d_k = q.shape[-1]
        inv_sqrt_dk = 1.0 / math.sqrt(d_k)

        # Fold the 1/sqrt(d_k) scale into the per-step k tile (tile_k*D elements),
        # not the resident q (which would be re-scaled every grid step).
        k_scaled = (k.astype(jnp.float32) * inv_sqrt_dk).astype(mxu_dtype)

        # scores[i, j] = <k_i/sqrt(d_k), q_j>  -> (TILE_K, Nq).
        # Contract on D directly; no XLU transpose of q.
        scores = lax.dot_general(
            k_scaled, q.astype(mxu_dtype),
            dimension_numbers=(((1,), (1,)), ((), ())),
            preferred_element_type=jnp.float32,
        )

        # Numerically-stable softmax over the last (Nq) axis, with deferred normalization.
        m = jnp.max(scores, axis=-1, keepdims=True)
        # Fuse the MXU-operand cast into the exp pass (bf16 on bf16 inputs).
        e = jnp.exp(scores - m).astype(e_dtype)
        # Keep the denominator accumulation in f32 regardless of e's dtype.
        denom = jnp.sum(e, axis=-1, keepdims=True, dtype=jnp.float32)

        # out = (e @ v) / denom  -> normalize the (TILE_K, D) output instead of the
        # (TILE_K, Nq) probability matrix; exact division (tiny op) keeps f32 numerics.
        out = lax.dot_general(
            e, v.astype(mxu_dtype),
            dimension_numbers=(((1,), (0,)), ((), ())),
            preferred_element_type=jnp.float32,
        )
        o_ref[0] = (out / denom).astype(o_ref.dtype)

    return kernel


def _vmem_limit_bytes():
    """Generation-aware scoped-VMEM limit: ~40 MiB on 64 MiB parts (v7x),
    ~96 MiB on 128 MiB parts (v5e/v6e)."""
    cap = None
    try:
        cap = getattr(pltpu.get_tpu_info(), "vmem_capacity_bytes", None)
    except Exception:
        cap = None
    if not cap:
        cap = 64 * 1024 * 1024  # conservative fallback (v7x per-TC)
    return max(min(3 * cap // 4, cap - 24 * 1024 * 1024), 16 * 1024 * 1024)


_TILE_CANDIDATES = (2048, 1024, 512, 256, 128)


def _choose_tile_k(nk, nq, d, in_itemsize, e_itemsize, budget_bytes):
    """Largest Nk tile (divisor of Nk, sublane-aligned for the dtype) whose per-step
    VMEM footprint fits the budget.  Footprint includes double-buffered k/out tiles,
    double-buffered resident q/v, f32 scores, e, the scaled-k temp and the f32 out temp."""

    def footprint(t):
        resident = 2 * 2 * nq * d * in_itemsize                       # q + v, double-buffered
        pipelined = 2 * 2 * t * d * in_itemsize                       # k tile + out tile, double-buffered
        temps = t * nq * 4 + t * nq * e_itemsize                      # f32 scores + e
        temps += t * d * 4 + t * d * in_itemsize                      # f32 out temp + scaled-k temp
        return resident + pipelined + temps

    min_tile = max(8, 32 // in_itemsize)  # sublane packing minimum: 8 f32 / 16 bf16 / 32 int8
    for t in _TILE_CANDIDATES:
        if t > nk or nk % t != 0 or t % min_tile != 0:
            continue
        if footprint(t) <= budget_bytes:
            return t
    # Full-Nk block is always a legal block shape; use it only if it actually fits.
    if footprint(nk) <= budget_bytes:
        return nk
    # TODO(synk): implement the Nq-tiled flash-style path (online softmax with m/l/acc
    # scratch, reduction axis last + "arbitrary") for very long Nq where q/v residency
    # alone exceeds the VMEM budget.
    raise NotImplementedError(
        "q/v residency exceeds the VMEM budget for (Nq=%d, D=%d); needs an Nq-tiled "
        "online-softmax path." % (nq, d))


def self_attention(k, q, v, *, mxu_dtype=None, tile_k=None):
    """Pallas version of SelfAttention.forward(k, q, v) (default, non-memory-efficient path).

    Layout: [B, N, D] = (batch, sequence, feature).
    Fast path: D % 128 == 0 (lane-dense stores / full MXU contraction).
    """
    B, Nk, D = k.shape
    Bq, Nq, Dq = q.shape
    assert B == Bq and D == Dq and v.shape == (B, Nq, D)

    in_dtype = jnp.dtype(k.dtype)
    if mxu_dtype is None:
        # bf16 inputs -> bf16 MXU operands (f32 accumulate).  f32 inputs keep f32
        # operands by default to preserve the reference numerics; pass
        # mxu_dtype=jnp.bfloat16 explicitly for the faster multi-pass-free MXU path.
        mxu_dtype = jnp.bfloat16 if in_dtype == jnp.dtype(jnp.bfloat16) else in_dtype
    mxu_dtype = jnp.dtype(mxu_dtype)
    e_dtype = mxu_dtype  # exp result feeds the second matmul directly

    vmem_limit = _vmem_limit_bytes()
    if tile_k is None:
        tile_k = _choose_tile_k(
            Nk, Nq, D, in_dtype.itemsize, jnp.dtype(e_dtype).itemsize,
            budget_bytes=vmem_limit - 4 * 1024 * 1024)  # headroom for compiler scratch
    assert Nk % tile_k == 0, (Nk, tile_k)

    grid = (B, Nk // tile_k)
    kernel = _make_self_attention_kernel(mxu_dtype, e_dtype)

    return pl.pallas_call(
        kernel,
        out_shape=jax.ShapeDtypeStruct((B, Nk, D), in_dtype),
        grid_spec=pltpu.PrefetchScalarGridSpec(
            num_scalar_prefetch=0,
            grid=grid,
            in_specs=[
                pl.BlockSpec((1, tile_k, D), lambda b, i: (b, i, 0)),  # k tile (pipelined)
                pl.BlockSpec((1, Nq, D), lambda b, i: (b, 0, 0)),      # q (resident per batch)
                pl.BlockSpec((1, Nq, D), lambda b, i: (b, 0, 0)),      # v (resident per batch)
            ],
            out_specs=pl.BlockSpec((1, tile_k, D), lambda b, i: (b, i, 0)),
        ),
        compiler_params=pltpu.CompilerParams(
            dimension_semantics=("parallel", "parallel"),
            vmem_limit_bytes=vmem_limit,
        ),
    )(k, q, v)


def _reference(k, q, v):
    d_k = q.shape[-1]
    scores = jnp.matmul(k, jnp.swapaxes(q, -2, -1)) / math.sqrt(d_k)
    p = jax.nn.softmax(scores, axis=-1)
    return jnp.matmul(p, v)


if __name__ == "__main__":
    # --- small f32 test matching the module's default usage ---
    kk, kq, kv = jax.random.split(jax.random.PRNGKey(0), 3)
    B, N, D = 2, 8, 32  # batch, seq, hidden
    k = jax.random.normal(kk, (B, N, D), dtype=jnp.float32)
    q = jax.random.normal(kq, (B, N, D), dtype=jnp.float32)
    v = jax.random.normal(kv, (B, N, D), dtype=jnp.float32)

    out = jax.block_until_ready(self_attention(k, q, v))
    ref = _reference(k, q, v)
    assert out.shape == (B, N, D)
    # Exact (non-approx) normalization -> tight f32 tolerance.
    assert jnp.allclose(out, ref, atol=1e-3, rtol=1e-3), "f32 mismatch vs reference"

    # --- bf16 test exercising the tiled (B, Nk-tiles) grid and bf16 MXU path ---
    kk2, kq2, kv2 = jax.random.split(jax.random.PRNGKey(1), 3)
    B2, N2, D2 = 1, 512, 128
    k2 = jax.random.normal(kk2, (B2, N2, D2), dtype=jnp.bfloat16)
    q2 = jax.random.normal(kq2, (B2, N2, D2), dtype=jnp.bfloat16)
    v2 = jax.random.normal(kv2, (B2, N2, D2), dtype=jnp.bfloat16)

    out2 = jax.block_until_ready(self_attention(k2, q2, v2, tile_k=256))
    ref2 = _reference(k2.astype(jnp.float32), q2.astype(jnp.float32),
                      v2.astype(jnp.float32))
    assert out2.shape == (B2, N2, D2)
    assert jnp.allclose(out2.astype(jnp.float32), ref2, atol=5e-2, rtol=5e-2), \
        "bf16 mismatch vs reference"

    print("KERNEL_OK")
</pallas_src>

<mosaic_0001>
module attributes {stable_mosaic.version = 11 : i64} {
  func.func @kernel(%arg0: i32, %arg1: i32, %arg2: memref<1x8x32xf32, #tpu.memory_space<vmem>>, %arg3: memref<1x8x32xf32, #tpu.memory_space<vmem>>, %arg4: memref<1x8x32xf32, #tpu.memory_space<vmem>>, %arg5: memref<1x8x32xf32, #tpu.memory_space<vmem>>) attributes {dimension_semantics = [#tpu.dimension_semantics<parallel>, #tpu.dimension_semantics<parallel>], iteration_bounds = array<i64: 2, 1>, scalar_prefetch = 0 : i64, scratch_operands = 0 : i64, tpu.core_type = #tpu.core_type<tc>, window_params = [{transform_indices = @transform_0, window_bounds = array<i64: 1, 8, 32>}, {transform_indices = @transform_1, window_bounds = array<i64: 1, 8, 32>}, {transform_indices = @transform_2, window_bounds = array<i64: 1, 8, 32>}, {transform_indices = @transform_3, window_bounds = array<i64: 1, 8, 32>}]} {
    %c0 = arith.constant 0 : index
    %c0_0 = arith.constant 0 : index
    %c0_1 = arith.constant 0 : index
    %0 = vector.load %arg2[%c0, %c0_0, %c0_1] : memref<1x8x32xf32, #tpu.memory_space<vmem>>, vector<1x8x32xf32>
    %1 = vector.shape_cast %0 : vector<1x8x32xf32> to vector<8x32xf32>
    %c0_2 = arith.constant 0 : index
    %c0_3 = arith.constant 0 : index
    %c0_4 = arith.constant 0 : index
    %2 = vector.load %arg3[%c0_2, %c0_3, %c0_4] : memref<1x8x32xf32, #tpu.memory_space<vmem>>, vector<1x8x32xf32>
    %3 = vector.shape_cast %2 : vector<1x8x32xf32> to vector<8x32xf32>
    %c0_5 = arith.constant 0 : index
    %c0_6 = arith.constant 0 : index
    %c0_7 = arith.constant 0 : index
    %4 = vector.load %arg4[%c0_5, %c0_6, %c0_7] : memref<1x8x32xf32, #tpu.memory_space<vmem>>, vector<1x8x32xf32>
    %5 = vector.shape_cast %4 : vector<1x8x32xf32> to vector<8x32xf32>
    %cst = arith.constant 0.176776692 : f32
    %6 = vector.broadcast %cst : f32 to vector<8x32xf32>
    %7 = arith.mulf %1, %6 : vector<8x32xf32>
    %cst_8 = arith.constant dense<0.000000e+00> : vector<8x8xf32>
    %8 = tpu.matmul %7, %3, %cst_8 {dimension_numbers = #tpu.dot_dimension_numbers<[1], [1], [0], [0], [0, 0, 1, 0], [], []>} : vector<8x32xf32>, vector<8x32xf32>, vector<8x8xf32> -> vector<8x8xf32>
    %cst_9 = arith.constant dense<0xFF800000> : vector<8xf32>
    %9 = vector.multi_reduction <maximumf>, %8, %cst_9 [1] : vector<8x8xf32> to vector<8xf32>
    %10 = vector.shape_cast %9 : vector<8xf32> to vector<8x1xf32>
    %11 = vector.broadcast %10 : vector<8x1xf32> to vector<8x8xf32>
    %12 = arith.subf %8, %11 : vector<8x8xf32>
    %13 = math.exp %12 : vector<8x8xf32>
    %cst_10 = arith.constant dense<0.000000e+00> : vector<8xf32>
    %14 = vector.multi_reduction <add>, %13, %cst_10 [1] : vector<8x8xf32> to vector<8xf32>
    %15 = vector.shape_cast %14 : vector<8xf32> to vector<8x1xf32>
    %cst_11 = arith.constant dense<0.000000e+00> : vector<8x32xf32>
    %16 = tpu.matmul %13, %5, %cst_11 {dimension_numbers = #tpu.dot_dimension_numbers<[1], [0], [0], [1], [0, 0, 1, 1], [], []>} : vector<8x8xf32>, vector<8x32xf32>, vector<8x32xf32> -> vector<8x32xf32>
    %17 = vector.broadcast %15 : vector<8x1xf32> to vector<8x32xf32>
    %18 = arith.divf %16, %17 : vector<8x32xf32>
    %c0_12 = arith.constant 0 : index
    %c0_13 = arith.constant 0 : index
    %c0_14 = arith.constant 0 : index
    %19 = vector.load %arg5[%c0_12, %c0_13, %c0_14] : memref<1x8x32xf32, #tpu.memory_space<vmem>>, vector<1x8x32xf32>
    %20 = vector.shape_cast %19 : vector<1x8x32xf32> to vector<8x32xf32>
    %21 = vector.shape_cast %18 : vector<8x32xf32> to vector<1x8x32xf32>
    tpu.vector_store %arg5[%c0_12, %c0_13, %c0_14], %21 {strides = array<i32>} : memref<1x8x32xf32, #tpu.memory_space<vmem>>, vector<1x8x32xf32>,
    return
  }
  func.func @transform_0(%arg0: i32, %arg1: i32) -> (i32, i32, i32) {
    %c0_i32 = arith.constant 0 : i32
    %c0_i32_0 = arith.constant 0 : i32
    return %arg0, %arg1, %c0_i32 : i32, i32, i32
  }
  func.func @transform_1(%arg0: i32, %arg1: i32) -> (i32, i32, i32) {
    %c0_i32 = arith.constant 0 : i32
    %c0_i32_0 = arith.constant 0 : i32
    %c0_i32_1 = arith.constant 0 : i32
    return %arg0, %c0_i32, %c0_i32_0 : i32, i32, i32
  }
  func.func @transform_2(%arg0: i32, %arg1: i32) -> (i32, i32, i32) {
    %c0_i32 = arith.constant 0 : i32
    %c0_i32_0 = arith.constant 0 : i32
    %c0_i32_1 = arith.constant 0 : i32
    return %arg0, %c0_i32, %c0_i32_0 : i32, i32, i32
  }
  func.func @transform_3(%arg0: i32, %arg1: i32) -> (i32, i32, i32) {
    %c0_i32 = arith.constant 0 : i32
    %c0_i32_0 = arith.constant 0 : i32
    return %arg0, %arg1, %c0_i32 : i32, i32, i32
  }
}

</mosaic_0001>

<llo_original>
// kernel: tpu_custom_call.1
$region0: #{tpu_custom_call.1}
  #allocation0 [shape = 'u32[]', space=smem, size = 0x4, offset = 0x4, fixed_abs, tag = 'smem constant byte address 0x4 - core index']
  #allocation1 [shape = 'u32[144,128]{1,0:T(1,128)}', space=vmem, size = 0x12000, scoped, tag = 'internal scratch']
  %s0 = inlined_call_operand.hbm [shape: f32[2,8,32], index: 0, kind: input, shape index: {}]
  %s1 = inlined_call_operand.hbm [shape: f32[2,8,32], index: 1, kind: input, shape index: {}]
  %s2 = inlined_call_operand.hbm [shape: f32[2,8,32], index: 2, kind: input, shape index: {}]
  %s3 = inlined_call_operand.hbm [shape: f32[2,8,32], index: 3, kind: output, shape index: {}]
  %s4 = sld [smem:[#allocation0]]
  $region57: #{tpu_custom_call.1} parent=0
    _
  %s6 = ssub.s32 1, %s4
  %s7 = scalar_select 0, %s6, %s4
  $region1: #{tpu_custom_call.1} parent=0
    #allocation2 [shape = 'u8[8192]{0}', space=vmem, size = 0x2000, scoped, tag = 'input window, operand 0']
    #allocation3 [shape = 's32[2]{0}', space=sflag, size = 0x8, scoped, tag = 'scoped memory for tpu_custom_call.1']
    #allocation4 [shape = 's32[2]{0}', space=sflag, size = 0x8, scoped, tag = 'scoped memory for tpu_custom_call.1']
    #allocation5 [shape = 'u8[8192]{0}', space=vmem, size = 0x2000, scoped, tag = 'input window, operand 1']
    #allocation6 [shape = 's32[2]{0}', space=sflag, size = 0x8, scoped, tag = 'scoped memory for tpu_custom_call.1']
    #allocation7 [shape = 'u8[8192]{0}', space=vmem, size = 0x2000, scoped, tag = 'input window, operand 2']
    #allocation8 [shape = 'u8[8192]{0}', space=vmem, size = 0x2000, scoped, tag = 'output window, operand 0']
    %8 = vsyncpa [#allocation3], 0
    %s9 = scalar_lea.sflag [#allocation3], 1
    %10 = vsyncpa %s9, 0
    %11 = vsyncpa [#allocation6], 0
    %s12 = scalar_lea.sflag [#allocation6], 1
    %13 = vsyncpa %s12, 0
    %14 = vsyncpa [#allocation4], 0
    %s15 = scalar_lea.sflag [#allocation4], 1
    %16 = vsyncpa %s15, 0
    loop: start=0, step=1, limit=4
    $region2: #{tpu_custom_call.1} parent=1 // loop_pre_header
      _
    $region3: #{tpu_custom_call.1} parent=1 // loop_header
      %s18 = sphi 0, %s22
      %p19 = scmp.ge.s32.totalorder %s18, 4
      %s25 = sphi 0, %s37
      %s26 = sphi 0, %s33
      %s27 = sphi 0, %s25
      %s28 = sphi 0, %s26
      %s29 = sphi 0, %s27
      %s30 = sphi 0, %s28
      %s42 = sphi 0, %s44
      %s45 = sphi 0, %s42
      %s46 = sphi 0, %s45
      %s62 = sphi 0, %s46
      %s68 = sphi 0, %s70
      %s71 = sphi 0, %s68
      %s72 = sphi 0, %s71
      %s88 = sphi 0, %s72
      %s94 = sphi 0, %s96
      %s97 = sphi 0, %s94
      %s98 = sphi 0, %s97
      %s114 = sphi 0, %s98
      %s122 = sphi 0, %s124
      %s125 = sphi 0, %s122
      %s126 = sphi 0, %s125
      %s142 = sphi 0, %s126
    $region4: #{tpu_custom_call.1} parent=1 // loop_header_branch
      %21 = sbr.rel (%p19) target = $region8
    $region5: #{tpu_custom_call.1} parent=1 // loop_body
      %s23 = ssub.s32 %s18, 1
      %s24 = ssub.s32 %s18, 2
      %s31 = sadd.s32 1, %s26
      %p32 = scmp.ge.s32.totalorder %s31, 1
      %s33 = scalar_select %p32, 0, %s31
      %s34 = sadd.s32 1, %s25
      %s35 = scalar_select %p32, %s34, %s25
      %p36 = scmp.ge.s32.totalorder %s35, 2
      %s37 = scalar_select %p36, 0, %s35
      %s38 = ssub.s32 %s25, %s37
      %s39 = ssub.s32 %s26, %s33
      %s40 = sor.u32 %s38, %s39
      %p41 = scmp.eq.s32.totalorder %s40, 0
      %s43 = sadd.s32 %s42, 1
      %s44 = scalar_select %p41, %s42, %s43
      %p47 = pneg %p41
      %p48 = scmp.eq.s32.totalorder %s18, 1
      %p49 = por %p47, %p48
      %p50 = scmp.ne.s32.totalorder %s42, %s45
      %p51 = scmp.eq.s32.totalorder %s18, 0
      %p52 = por %p50, %p51
      %p53 = scmp.ne.s32.totalorder %s42, %s45
      %p54 = scmp.eq.s32.totalorder %s23, 1
      %p55 = por %p53, %p54
      %p56 = scmp.ne.s32.totalorder %s45, %s46
      %p57 = scmp.eq.s32.totalorder %s23, 0
      %p58 = por %p56, %p57
      %p59 = scmp.ne.s32.totalorder %s45, %s46
      %p60 = scmp.eq.s32.totalorder %s24, 1
      %p61 = por %p59, %p60
      %p63 = scmp.ne.s32.totalorder %s46, %s62
      %p64 = scmp.eq.s32.totalorder %s24, 0
      %p65 = por %p63, %p64
      %s66 = ssub.s32 %s25, %s37
      %p67 = scmp.eq.s32.totalorder %s66, 0
      %s69 = sadd.s32 %s68, 1
      %s70 = scalar_select %p67, %s68, %s69
      %p73 = pneg %p67
      %p74 = scmp.eq.s32.totalorder %s18, 1
      %p75 = por %p73, %p74
      %p76 = scmp.ne.s32.totalorder %s68, %s71
      %p77 = scmp.eq.s32.totalorder %s18, 0
      %p78 = por %p76, %p77
      %p79 = scmp.ne.s32.totalorder %s68, %s71
      %p80 = scmp.eq.s32.totalorder %s23, 1
      %p81 = por %p79, %p80
      %p82 = scmp.ne.s32.totalorder %s71, %s72
      %p83 = scmp.eq.s32.totalorder %s23, 0
      %p84 = por %p82, %p83
      %p85 = scmp.ne.s32.totalorder %s71, %s72
      %p86 = scmp.eq.s32.totalorder %s24, 1
      %p87 = por %p85, %p86
      %p89 = scmp.ne.s32.totalorder %s72, %s88
      %p90 = scmp.eq.s32.totalorder %s24, 0
      %p91 = por %p89, %p90
      %s92 = ssub.s32 %s25, %s37
      %p93 = scmp.eq.s32.totalorder %s92, 0
      %s95 = sadd.s32 %s94, 1
      %s96 = scalar_select %p93, %s94, %s95
      %p99 = pneg %p93
      %p100 = scmp.eq.s32.totalorder %s18, 1
      %p101 = por %p99, %p100
      %p102 = scmp.ne.s32.totalorder %s94, %s97
      %p103 = scmp.eq.s32.totalorder %s18, 0
      %p104 = por %p102, %p103
      %p105 = scmp.ne.s32.totalorder %s94, %s97
      %p106 = scmp.eq.s32.totalorder %s23, 1
      %p107 = por %p105, %p106
      %p108 = scmp.ne.s32.totalorder %s97, %s98
      %p109 = scmp.eq.s32.totalorder %s23, 0
      %p110 = por %p108, %p109
      %p111 = scmp.ne.s32.totalorder %s97, %s98
      %p112 = scmp.eq.s32.totalorder %s24, 1
      %p113 = por %p111, %p112
      %p115 = scmp.ne.s32.totalorder %s98, %s114
      %p116 = scmp.eq.s32.totalorder %s24, 0
      %p117 = por %p115, %p116
      %s118 = ssub.s32 %s25, %s37
      %s119 = ssub.s32 %s26, %s33
      %s120 = sor.u32 %s118, %s119
      %p121 = scmp.eq.s32.totalorder %s120, 0
      %s123 = sadd.s32 %s122, 1
      %s124 = scalar_select %p121, %s122, %s123
      %p127 = pneg %p121
      %p128 = scmp.eq.s32.totalorder %s18, 1
      %p129 = por %p127, %p128
      %p130 = scmp.ne.s32.totalorder %s122, %s125
      %p131 = scmp.eq.s32.totalorder %s18, 0
      %p132 = por %p130, %p131
      %p133 = scmp.ne.s32.totalorder %s122, %s125
      %p134 = scmp.eq.s32.totalorder %s23, 1
      %p135 = por %p133, %p134
      %p136 = scmp.ne.s32.totalorder %s125, %s126
      %p137 = scmp.eq.s32.totalorder %s23, 0
      %p138 = por %p136, %p137
      %p139 = scmp.ne.s32.totalorder %s125, %s126
      %p140 = scmp.eq.s32.totalorder %s24, 1
      %p141 = por %p139, %p140
      %p143 = scmp.ne.s32.totalorder %s126, %s142
      %p144 = scmp.eq.s32.totalorder %s24, 0
      %p145 = por %p143, %p144
      %p146 = scmp.le.s32.totalorder 1, %s18
      %p147 = scmp.lt.s32.totalorder %s18, 3
      %p148 = pnand %p146, %p147
      %p149 = pneg %p148
      // Predicated region
      $region9: #{tpu_custom_call.1} parent=5 // pred_check
        _
      $region10: #{tpu_custom_call.1} parent=5 // pred_check_branch
        %151 = sbr.rel (%p148) target = $region12
      $region11: #{tpu_custom_call.1} parent=5 // pred_region
        %s152 = ssub.s32 %s18, 1
      $region12: #{tpu_custom_call.1} parent=5 // pred_fallthru
        _
      %p153 = scmp.lt.s32.totalorder %s18, 2
      // Predicated region
      $region13: #{tpu_custom_call.1} parent=5 // pred_check
        %p154 = pneg %p153
      $region14: #{tpu_custom_call.1} parent=5 // pred_check_branch
        %156 = sbr.rel (%p154) target = $region16
      $region15: #{tpu_custom_call.1} parent=5 // pred_region
        // Predicated region
        $region17: #{tpu_custom_call.1} parent=15 // pred_check
          %p157 = pneg %p52
        $region18: #{tpu_custom_call.1} parent=15 // pred_check_branch
          %159 = sbr.rel (%p157) target = $region20
        $region19: #{tpu_custom_call.1} parent=15 // pred_region
          %s160 = sand.u32 %s42, 1
          %s161 = scalar_lea.sflag [#allocation3], %s160
          %s162 = sand.u32 %s42, 1
          %s163 = smul.addr %s162, 8
          %s164 = scalar_lea.vmem [#allocation2], %s163
          %s166 = ssub.s32 128, 128
          %167 = vsyncadd %s161, %s166
          %s168 = sadd.s32 %s26, %s25
          %s169 = smul.addr %s168, 128
          %s170 = scalar_lea.hbm %s0, %s169
          %s172 = sshll.u32 %s164, 4
          %s173 = int_to_ptr.vmem [resolvable:$true] %s172
          %175 = dma.hbm_to_vmem [thread:$0]  %s170, 128, %s173, %s161
        $region20: #{tpu_custom_call.1} parent=15 // pred_fallthru
          _
        // Predicated region
        $region21: #{tpu_custom_call.1} parent=15 // pred_check
          %p176 = pneg %p78
        $region22: #{tpu_custom_call.1} parent=15 // pred_check_branch
          %178 = sbr.rel (%p176) target = $region24
        $region23: #{tpu_custom_call.1} parent=15 // pred_region
          %s179 = sand.u32 %s18, 1
          %s180 = scalar_lea.sflag [#allocation6], %s179
          %s181 = sand.u32 %s68, 1
          %s182 = smul.addr %s181, 8
          %s183 = scalar_lea.vmem [#allocation5], %s182
          %s185 = ssub.s32 128, 128
          %186 = vsyncadd %s180, %s185
          %s187 = smul.addr %s25, 128
          %s188 = scalar_lea.hbm %s1, %s187
          %s190 = sshll.u32 %s183, 4
          %s191 = int_to_ptr.vmem [resolvable:$true] %s190
          %193 = dma.hbm_to_vmem [thread:$0]  %s188, 128, %s191, %s180
        $region24: #{tpu_custom_call.1} parent=15 // pred_fallthru
          _
        // Predicated region
        $region25: #{tpu_custom_call.1} parent=15 // pred_check
          %p194 = pneg %p104
        $region26: #{tpu_custom_call.1} parent=15 // pred_check_branch
          %196 = sbr.rel (%p194) target = $region28
        $region27: #{tpu_custom_call.1} parent=15 // pred_region
          %s197 = sand.u32 %s18, 1
          %s198 = scalar_lea.sflag [#allocation6], %s197
          %s199 = sand.u32 %s94, 1
          %s200 = smul.addr %s199, 8
          %s201 = scalar_lea.vmem [#allocation7], %s200
          %s203 = ssub.s32 128, 128
          %204 = vsyncadd %s198, %s203
          %s205 = smul.addr %s25, 128
          %s206 = scalar_lea.hbm %s2, %s205
          %s208 = sshll.u32 %s201, 4
          %s209 = int_to_ptr.vmem [resolvable:$true] %s208
          %211 = dma.hbm_to_vmem [thread:$0]  %s206, 128, %s209, %s198
        $region28: #{tpu_custom_call.1} parent=15 // pred_fallthru
          _
      $region16: #{tpu_custom_call.1} parent=5 // pred_fallthru
        _
      %p212 = scmp.le.s32.totalorder 1, %s18
      %p213 = scmp.lt.s32.totalorder %s18, 3
      %p214 = pnand %p212, %p213
      %p215 = pneg %p214
      // Predicated region
      $region29: #{tpu_custom_call.1} parent=5 // pred_check
        _
      $region30: #{tpu_custom_call.1} parent=5 // pred_check_branch
        %217 = sbr.rel (%p214) target = $region32
      $region31: #{tpu_custom_call.1} parent=5 // pred_region
        %s218 = ssub.s32 %s18, 1
        %s219 = sand.u32 %s45, 1
        %s220 = scalar_lea.sflag [#allocation3], %s219
        %s221 = sand.u32 %s45, 1
        %s222 = smul.addr %s221, 8
        %s223 = scalar_lea.vmem [#allocation2], %s222
        // Predicated region
        $region33: #{tpu_custom_call.1} parent=31 // pred_check
          %p224 = pneg %p58
        $region34: #{tpu_custom_call.1} parent=31 // pred_check_branch
          %226 = sbr.rel (%p224) target = $region36
        $region35: #{tpu_custom_call.1} parent=31 // pred_region
          %227 = dma.done %s220, 128
        $region36: #{tpu_custom_call.1} parent=31 // pred_fallthru
          _
        %s228 = sand.u32 %s23, 1
        %s229 = scalar_lea.sflag [#allocation6], %s228
        %s230 = sand.u32 %s71, 1
        %s231 = smul.addr %s230, 8
        %s232 = scalar_lea.vmem [#allocation5], %s231
        // Predicated region
        $region37: #{tpu_custom_call.1} parent=31 // pred_check
          %p233 = pneg %p84
        $region38: #{tpu_custom_call.1} parent=31 // pred_check_branch
          %235 = sbr.rel (%p233) target = $region40
        $region39: #{tpu_custom_call.1} parent=31 // pred_region
          %236 = dma.done %s229, 128
        $region40: #{tpu_custom_call.1} parent=31 // pred_fallthru
          _
        %s237 = sand.u32 %s23, 1
        %s238 = scalar_lea.sflag [#allocation6], %s237
        %s239 = sand.u32 %s97, 1
        %s240 = smul.addr %s239, 8
        %s241 = scalar_lea.vmem [#allocation7], %s240
        // Predicated region
        $region41: #{tpu_custom_call.1} parent=31 // pred_check
          %p242 = pneg %p110
        $region42: #{tpu_custom_call.1} parent=31 // pred_check_branch
          %244 = sbr.rel (%p242) target = $region44
        $region43: #{tpu_custom_call.1} parent=31 // pred_region
          %245 = dma.done %s238, 128
        $region44: #{tpu_custom_call.1} parent=31 // pred_fallthru
          _
        %s246 = sand.u32 %s45, 1
        %s247 = scalar_lea.sflag [#allocation3], %s246
        %s248 = sand.u32 %s45, 1
        %s249 = smul.addr %s248, 8
        %s250 = scalar_lea.vmem [#allocation2], %s249
        %p251 = pneg %p58
        %p252 = pneg %p55
        %s253 = sand.u32 %s23, 1
        %s254 = scalar_lea.sflag [#allocation6], %s253
        %s255 = sand.u32 %s71, 1
        %s256 = smul.addr %s255, 8
        %s257 = scalar_lea.vmem [#allocation5], %s256
        %p258 = pneg %p84
        %p259 = pneg %p81
        %s260 = sand.u32 %s23, 1
        %s261 = scalar_lea.sflag [#allocation6], %s260
        %s262 = sand.u32 %s97, 1
        %s263 = smul.addr %s262, 8
        %s264 = scalar_lea.vmem [#allocation7], %s263
        %p265 = pneg %p110
        %p266 = pneg %p107
        %p267 = pneg %p138
        %p268 = pneg %p135
        %s269 = sand.u32 %s125, 1
        %s270 = scalar_lea.sflag [#allocation4], %s269
        %s271 = sand.u32 %s125, 1
        %s272 = smul.addr %s271, 8
        %s273 = scalar_lea.vmem [#allocation8], %s272
        %v274 = vld [vmem:[%s223] sm:$0xff]
        %v275 = vld [vmem:[%s232] sm:$0xff]
        %v276 = vld [vmem:[%s241] sm:$0xff]
        %v277 = vmul.f32 %v274, 0.17677669
        %vm278 = vcmask 261120
        %v280 = vsel %vm278, %v277, 0
        %v283 = vsel %vm278, %v275, 0
        %285 = vmatprep.subr.mxu0 0.0
        %286 = vmatpush1.xpose.msra.mxu0 %v283
        %287 = vmatprep.subr.mxu0 0.0
        %288 = vmatpush1.xpose.msra.mxu0 0.0
        %289 = vmatprep.subr.mxu0 0.0
        %290 = vmatpush1.xpose.msra.mxu0 0.0
        %291 = vmatprep.subr.mxu0 0.0
        %292 = vmatpush1.xpose.msra.mxu0 0.0
        %293 = vmatprep.subr.mxu0 0.0
        %294 = vmatpush1.xpose.msra.mxu0 0.0
        %295 = vmatprep.subr.mxu0 0.0
        %296 = vmatpush1.xpose.msra.mxu0 0.0
        %297 = vmatprep.subr.mxu0 0.0
        %298 = vmatpush1.xpose.msra.mxu0 0.0
        %299 = vmatprep.subr.mxu0 0.0
        %300 = vmatpush1.xpose.msra.mxu0 0.0
        %301 = vmatprep.subr.mxu0 0.0
        %302 = vmatpush1.xpose.msra.mxu0 0.0
        %303 = vmatprep.subr.mxu0 0.0
        %304 = vmatpush1.xpose.msra.mxu0 0.0
        %305 = vmatprep.subr.mxu0 0.0
        %306 = vmatpush1.xpose.msra.mxu0 0.0
        %307 = vmatprep.subr.mxu0 0.0
        %308 = vmatpush1.xpose.msra.mxu0 0.0
        %309 = vmatprep.subr.mxu0 0.0
        %310 = vmatpush1.xpose.msra.mxu0 0.0
        %311 = vmatprep.subr.mxu0 0.0
        %312 = vmatpush1.xpose.msra.mxu0 0.0
        %313 = vmatprep.subr.mxu0 0.0
        %314 = vmatpush1.xpose.msra.mxu0 0.0
        %315 = vmatprep.subr.mxu0 0.0
        %316 = vmatpush1.xpose.msra.mxu0 0.0
        %317 = vmatprep.subr.mxu0 0.0
        %318 = vmatpush1.xpose.msra.mxu0 0.0
        %319 = vmatprep.subr.mxu0 0.0
        %320 = vmatpush1.xpose.msra.mxu0 0.0
        %321 = vmatprep.subr.mxu0 0.0
        %322 = vmatpush1.xpose.msra.mxu0 0.0
        %323 = vmatprep.subr.mxu0 0.0
        %324 = vmatpush1.xpose.msra.mxu0 0.0
        %325 = vmatprep.subr.mxu0 0.0
        %326 = vmatpush1.xpose.msra.mxu0 0.0
        %327 = vmatprep.subr.mxu0 0.0
        %328 = vmatpush1.xpose.msra.mxu0 0.0
        %329 = vmatprep.subr.mxu0 0.0
        %330 = vmatpush1.xpose.msra.mxu0 0.0
        %331 = vmatprep.subr.mxu0 0.0
        %332 = vmatpush1.xpose.msra.mxu0 0.0
        %333 = vmatprep.subr.mxu0 0.0
        %334 = vmatpush1.xpose.msra.mxu0 0.0
        %335 = vmatprep.subr.mxu0 0.0
        %336 = vmatpush1.xpose.msra.mxu0 0.0
        %337 = vmatprep.subr.mxu0 0.0
        %338 = vmatpush1.xpose.msra.mxu0 0.0
        %339 = vmatprep.subr.mxu0 0.0
        %340 = vmatpush1.xpose.msra.mxu0 0.0
        %341 = vmatprep.subr.mxu0 0.0
        %342 = vmatpush1.xpose.msra.mxu0 0.0
        %343 = vmatprep.subr.mxu0 0.0
        %344 = vmatpush1.xpose.msra.mxu0 0.0
        %345 = vmatprep.subr.mxu0 0.0
        %346 = vmatpush1.xpose.msra.mxu0 0.0
        %347 = vmatprep.subr.mxu0 0.0
        %348 = vmatpush1.xpose.msra.mxu0 0.0
        %349 = vmatprep.mubr.f32.mxu0 0.0
        %350 = vmatmul.mubr.f32.gmra.mrb[0].mxu0 %v280
        %v351 = vpop.f32.mrb[0].mxu0
        %v352 = vadd.f32 0.0, %v351
        %v353 = vpop.f32.mrb[0].mxu0
        %354 = vdwg.mxu0
        %vm355 = vcmask 64512
        %v356 = vsel %vm355, %v352, -inf
        %357 = vmax.xlane.f32.xlu0 %v356
        %v358 = vpop.xlane.xlu0 %357
        %v359 = vsub.f32 %v352, %v358
        %v360 = vmul.f32 %v359, 1.442695
        %v361 = vpow.pop %v360
        %v362 = vsel %vm355, %v361, 0.0
        %363 = vadd.xlane.f32.xlu0 %v362
        %v364 = vpop.xlane.xlu0 %363
        %v366 = vsel %vm355, %v361, 0
        %368 = vmatprep.subr.mxu0 0.0
        %369 = vmatpush1.msra.mxu0 %v276
        %370 = vmatprep.subr.mxu0 0.0
        %371 = vmatpush1.msra.mxu0 0.0
        %372 = vmatprep.subr.mxu0 0.0
        %373 = vmatpush1.msra.mxu0 0.0
        %374 = vmatprep.subr.mxu0 0.0
        %375 = vmatpush1.msra.mxu0 0.0
        %376 = vmatprep.subr.mxu0 0.0
        %377 = vmatpush1.msra.mxu0 0.0
        %378 = vmatprep.subr.mxu0 0.0
        %379 = vmatpush1.msra.mxu0 0.0
        %380 = vmatprep.subr.mxu0 0.0
        %381 = vmatpush1.msra.mxu0 0.0
        %382 = vmatprep.subr.mxu0 0.0
        %383 = vmatpush1.msra.mxu0 0.0
        %384 = vmatprep.subr.mxu0 0.0
        %385 = vmatpush1.msra.mxu0 0.0
        %386 = vmatprep.subr.mxu0 0.0
        %387 = vmatpush1.msra.mxu0 0.0
        %388 = vmatprep.subr.mxu0 0.0
        %389 = vmatpush1.msra.mxu0 0.0
        %390 = vmatprep.subr.mxu0 0.0
        %391 = vmatpush1.msra.mxu0 0.0
        %392 = vmatprep.subr.mxu0 0.0
        %393 = vmatpush1.msra.mxu0 0.0
        %394 = vmatprep.subr.mxu0 0.0
        %395 = vmatpush1.msra.mxu0 0.0
        %396 = vmatprep.subr.mxu0 0.0
        %397 = vmatpush1.msra.mxu0 0.0
        %398 = vmatprep.subr.mxu0 0.0
        %399 = vmatpush1.msra.mxu0 0.0
        %400 = vmatprep.subr.mxu0 0.0
        %401 = vmatpush1.msra.mxu0 0.0
        %402 = vmatprep.subr.mxu0 0.0
        %403 = vmatpush1.msra.mxu0 0.0
        %404 = vmatprep.subr.mxu0 0.0
        %405 = vmatpush1.msra.mxu0 0.0
        %406 = vmatprep.subr.mxu0 0.0
        %407 = vmatpush1.msra.mxu0 0.0
        %408 = vmatprep.subr.mxu0 0.0
        %409 = vmatpush1.msra.mxu0 0.0
        %410 = vmatprep.subr.mxu0 0.0
        %411 = vmatpush1.msra.mxu0 0.0
        %412 = vmatprep.subr.mxu0 0.0
        %413 = vmatpush1.msra.mxu0 0.0
        %414 = vmatprep.subr.mxu0 0.0
        %415 = vmatpush1.msra.mxu0 0.0
        %416 = vmatprep.subr.mxu0 0.0
        %417 = vmatpush1.msra.mxu0 0.0
        %418 = vmatprep.subr.mxu0 0.0
        %419 = vmatpush1.msra.mxu0 0.0
        %420 = vmatprep.subr.mxu0 0.0
        %421 = vmatpush1.msra.mxu0 0.0
        %422 = vmatprep.subr.mxu0 0.0
        %423 = vmatpush1.msra.mxu0 0.0
        %424 = vmatprep.subr.mxu0 0.0
        %425 = vmatpush1.msra.mxu0 0.0
        %426 = vmatprep.subr.mxu0 0.0
        %427 = vmatpush1.msra.mxu0 0.0
        %428 = vmatprep.subr.mxu0 0.0
        %429 = vmatpush1.msra.mxu0 0.0
        %430 = vmatprep.subr.mxu0 0.0
        %431 = vmatpush1.msra.mxu0 0.0
        %432 = vmatprep.mubr.f32.mxu0 0.0
        %433 = vmatmul.mubr.f32.gmra.mrb[0].mxu0 %v366
        %v434 = vpop.f32.mrb[0].mxu0
        %v435 = vadd.f32 0.0, %v434
        %v436 = vpop.f32.mrb[0].mxu0
        %437 = vdwg.mxu0
        %v438 = vrcp.pop %v364
        %v439 = vmul.f32 %v435, %v438
        %440 = vst.msk [vmem:[%s273] sm:$0xff] %vm278, %v439
        %s441 = sand.u32 %s125, 1
        %s442 = scalar_lea.sflag [#allocation4], %s441
        %s443 = sand.u32 %s125, 1
        %s444 = smul.addr %s443, 8
        %s445 = scalar_lea.vmem [#allocation8], %s444
        // Predicated region
        $region45: #{tpu_custom_call.1} parent=31 // pred_check
          %p446 = pneg %p135
        $region46: #{tpu_custom_call.1} parent=31 // pred_check_branch
          %448 = sbr.rel (%p446) target = $region48
        $region47: #{tpu_custom_call.1} parent=31 // pred_region
          %s450 = ssub.s32 128, 128
          %451 = vsyncadd %s442, %s450
          %s452 = sadd.s32 %s28, %s27
          %s453 = smul.addr %s452, 128
          %s454 = scalar_lea.hbm %s3, %s453
          %s456 = sshll.u32 %s445, 4
          %s457 = int_to_ptr.vmem [resolvable:$true] %s456
          %459 = dma.vmem_to_hbm [thread:$0]  %s457, 128, %s454, %s442
        $region48: #{tpu_custom_call.1} parent=31 // pred_fallthru
          _
      $region32: #{tpu_custom_call.1} parent=5 // pred_fallthru
        _
      %p460 = scmp.le.s32.totalorder 2, %s18
      // Predicated region
      $region49: #{tpu_custom_call.1} parent=5 // pred_check
        %p461 = pneg %p460
      $region50: #{tpu_custom_call.1} parent=5 // pred_check_branch
        %463 = sbr.rel (%p461) target = $region52
      $region51: #{tpu_custom_call.1} parent=5 // pred_region
        %s464 = ssub.s32 %s18, 2
        // Predicated region
        $region53: #{tpu_custom_call.1} parent=51 // pred_check
          %p465 = pneg %p141
        $region54: #{tpu_custom_call.1} parent=51 // pred_check_branch
          %467 = sbr.rel (%p465) target = $region56
        $region55: #{tpu_custom_call.1} parent=51 // pred_region
          %s468 = sand.u32 %s126, 1
          %s469 = scalar_lea.sflag [#allocation4], %s468
          %s470 = sand.u32 %s126, 1
          %s471 = smul.addr %s470, 8
          %s472 = scalar_lea.vmem [#allocation8], %s471
          %473 = dma.done %s469, 128
        $region56: #{tpu_custom_call.1} parent=51 // pred_fallthru
          _
      $region52: #{tpu_custom_call.1} parent=5 // pred_fallthru
        _
    $region6: #{tpu_custom_call.1} parent=1 // loop_footer
      %s22 = sadd.s32 1, %s18
    $region7: #{tpu_custom_call.1} parent=1 // loop_footer_branch
      %17 = sbr.rel target = $region3
    $region8: #{tpu_custom_call.1} parent=1 // loop_exit
      _
    %474 = vsyncpa [#allocation3], 1
    %s475 = scalar_lea.sflag [#allocation3], 1
    %476 = vsyncpa %s475, 1
    %477 = vsyncpa [#allocation6], 1
    %s478 = scalar_lea.sflag [#allocation6], 1
    %479 = vsyncpa %s478, 1
    %480 = vsyncpa [#allocation4], 1
    %s481 = scalar_lea.sflag [#allocation4], 1
    %482 = vsyncpa %s481, 1

</llo_original>
